<compile_context>
chip_gen: v7x
topology: tpu7x:2x2x1
jax: 0.10.0
libtpu: 0.0.40
codegen_flags: <defaults>
</compile_context>

<pallas_src>
import functools

import jax
import jax.numpy as jnp
from jax.experimental import pallas as pl
from jax.experimental.pallas import tpu as pltpu


# ----------------------------- Stage 1: QKV projection -----------------------------

def _qkv_proj_kernel(x_ref, w_ref, o_ref):
    # Single lane-dense matmul: (t, D) @ (D, 3*inner), f32 accumulation.
    # Softmax scale is already folded into the Q columns of w on the host.
    o_ref[0] = jnp.dot(x_ref[0], w_ref[...],
                       preferred_element_type=jnp.float32).astype(o_ref.dtype)


# ------------------------ Stage 2: flash attention + out proj ----------------------

def _flash_kernel(q_ref, k_ref, v_ref, wo_ref, bo_ref, o_ref,
                  m_scr, l_scr, acc_scr, attn_scr, *, heads, dim_head):
    ki = pl.program_id(2)

    @pl.when(ki == 0)
    def _init():
        m_scr[...] = jnp.full(m_scr.shape, -jnp.inf, dtype=m_scr.dtype)
        l_scr[...] = jnp.zeros(l_scr.shape, dtype=l_scr.dtype)
        acc_scr[...] = jnp.zeros(acc_scr.shape, dtype=acc_scr.dtype)

    q = q_ref[0, 0]                                              # (H, tq, E) bf16 (pre-scaled)
    k = k_ref[0, 0]                                              # (H, tk, E) bf16
    v = v_ref[0, 0]                                              # (H, tk, E) bf16

    # Scores for all heads at once (head-batched MXU matmul, f32 accumulation).
    s = jnp.einsum('hqe,hke->hqk', q, k,
                   preferred_element_type=jnp.float32)           # (H, tq, tk)

    # Online softmax update.
    m_prev = m_scr[...]
    m_new = jnp.maximum(m_prev, jnp.max(s, axis=-1, keepdims=True))   # (H, tq, 1)
    alpha = jnp.exp(m_prev - m_new)
    # TODO(synk): on v6e/v7x compute exp on bf16 inputs (bf16 EUP) for ~2x exp tput.
    p = jnp.exp(s - m_new)
    l_scr[...] = alpha * l_scr[...] + jnp.sum(p, axis=-1, keepdims=True)
    acc_scr[...] = alpha * acc_scr[...] + jnp.einsum(
        'hqk,hke->hqe', p.astype(v.dtype), v,
        preferred_element_type=jnp.float32)                      # (H, tq, E)
    m_scr[...] = m_new

    @pl.when(ki == pl.num_programs(2) - 1)
    def _finalize():
        # Normalize (EUP reciprocal), relayout to a lane-dense (tq, H*E) buffer via
        # static per-head slice stores, then ONE matmul with contraction K = inner.
        inv_l = pl.reciprocal(l_scr[...], approx=True)           # (H, tq, 1)
        attn = acc_scr[...] * inv_l                              # (H, tq, E) f32
        for h in range(heads):                                   # static unroll
            attn_scr[:, h * dim_head:(h + 1) * dim_head] = attn[h]
        out = jnp.dot(attn_scr[...].astype(wo_ref.dtype), wo_ref[...],
                      preferred_element_type=jnp.float32)        # (tq, D)
        o_ref[0] = (out + bo_ref[...]).astype(o_ref.dtype)       # single lane-dense store


# ----------------------------------- Wrapper ---------------------------------------

def _tpu_kind():
    try:
        return jax.devices()[0].device_kind.lower()
    except Exception:
        return ""


def _default_block():
    kind = _tpu_kind()
    # v5e (and older) MXUs are 128-wide; v6e/v7x are 256-wide.
    if ("v3" in kind) or ("v4" in kind) or ("v5" in kind):
        return 128
    return 256


def _vmem_limit_bytes():
    kind = _tpu_kind()
    if "v7" in kind:
        # v7x has only 64 MiB VMEM per TensorCore — leave headroom for Mosaic
        # internal scratch and the double-buffered input pipeline.
        return 48 * 1024 * 1024
    return 64 * 1024 * 1024          # v5e/v6e have 128 MiB physical VMEM


def attention_forward(x, wq, wk, wv, wo, bo, *, heads, dim_head,
                      q_block=None, kv_block=None, compute_dtype=jnp.bfloat16):
    """x: (B, S, D); wq/wk/wv: (D, inner); wo: (inner, D); bo: (1, D)."""
    B, S, D = x.shape
    inner = heads * dim_head
    scale = float(dim_head) ** -0.5

    blk = _default_block()
    tq = min(q_block if q_block is not None else blk, S)
    tk = min(kv_block if kv_block is not None else blk, S)
    # v7x has 2 TensorCores: try to expose >= 2 parallel (b, qi) work items.
    if (B * (S // tq) < 2 and tq >= 16 and (tq // 2) % 8 == 0
            and S % (tq // 2) == 0):
        tq //= 2
    assert S % tq == 0 and S % tk == 0, "sequence length must divide tile sizes"

    # Fold the softmax scale into the Q weights, fuse Q/K/V into one (D, 3*inner)
    # weight, and cast MXU operands to bf16 once on the host (f32 accumulation
    # happens in-kernel via preferred_element_type).
    w_qkv = jnp.concatenate([wq * scale, wk, wv], axis=1).astype(compute_dtype)
    wo_c = wo.astype(compute_dtype)
    x_c = x.astype(compute_dtype)

    # ---- Stage 1: fused QKV projection (K/V projected once per token). ----
    tp = tq
    qkv = pl.pallas_call(
        _qkv_proj_kernel,
        out_shape=jax.ShapeDtypeStruct((B, S, 3 * inner), compute_dtype),
        grid_spec=pltpu.PrefetchScalarGridSpec(
            num_scalar_prefetch=0,
            grid=(B, S // tp),
            in_specs=[
                pl.BlockSpec((1, tp, D), lambda b, i: (b, i, 0)),        # x tile
                # TODO(synk): pipeline_mode=pl.Buffered(1) to single-buffer the
                # resident fused weight (constant index map) on v7x.
                pl.BlockSpec((D, 3 * inner), lambda b, i: (0, 0)),       # fused W_qkv
            ],
            out_specs=pl.BlockSpec((1, tp, 3 * inner), lambda b, i: (b, i, 0)),
        ),
        compiler_params=pltpu.CompilerParams(
            dimension_semantics=("parallel", "parallel"),
            vmem_limit_bytes=_vmem_limit_bytes()),
    )(x_c, w_qkv)

    # One relayout pass to head-major (3, B, H, S, E) — layout plumbing in XLA.
    qkv_hm = qkv.reshape(B, S, 3, heads, dim_head).transpose(2, 0, 3, 1, 4)

    # ---- Stage 2: flash attention + fused output projection. ----
    kernel = functools.partial(_flash_kernel, heads=heads, dim_head=dim_head)
    return pl.pallas_call(
        kernel,
        out_shape=jax.ShapeDtypeStruct((B, S, D), x.dtype),
        grid_spec=pltpu.PrefetchScalarGridSpec(
            num_scalar_prefetch=0,
            grid=(B, S // tq, S // tk),
            in_specs=[
                pl.BlockSpec((1, 1, heads, tq, dim_head),
                             lambda b, qi, ki: (0, b, 0, qi, 0)),         # Q tile
                pl.BlockSpec((1, 1, heads, tk, dim_head),
                             lambda b, qi, ki: (1, b, 0, ki, 0)),         # K tile
                pl.BlockSpec((1, 1, heads, tk, dim_head),
                             lambda b, qi, ki: (2, b, 0, ki, 0)),         # V tile
                # TODO(synk): pipeline_mode=pl.Buffered(1) for wo/bo (constant index
                # maps) to halve their resident footprint on v7x.
                pl.BlockSpec((inner, D), lambda b, qi, ki: (0, 0)),       # to_out W
                pl.BlockSpec((1, D), lambda b, qi, ki: (0, 0)),           # to_out b
            ],
            out_specs=pl.BlockSpec((1, tq, D), lambda b, qi, ki: (b, qi, 0)),
            scratch_shapes=[
                pltpu.VMEM((heads, tq, 1), jnp.float32),        # running max m
                pltpu.VMEM((heads, tq, 1), jnp.float32),        # running sum l
                pltpu.VMEM((heads, tq, dim_head), jnp.float32), # output accumulator
                pltpu.VMEM((tq, inner), jnp.float32),           # (tq, H*E) relayout buf
            ],
        ),
        compiler_params=pltpu.CompilerParams(
            dimension_semantics=("parallel", "parallel", "arbitrary"),
            vmem_limit_bytes=_vmem_limit_bytes()),
    )(qkv_hm, qkv_hm, qkv_hm, wo_c, bo)


# ----------------------------------- Reference --------------------------------------

def _reference(x, wq, wk, wv, wo, bo, *, heads, dim_head):
    B, S, D = x.shape
    scale = float(dim_head) ** -0.5
    q = (x @ wq).reshape(B, S, heads, dim_head).transpose(0, 2, 1, 3)
    k = (x @ wk).reshape(B, S, heads, dim_head).transpose(0, 2, 1, 3)
    v = (x @ wv).reshape(B, S, heads, dim_head).transpose(0, 2, 1, 3)
    s = jnp.einsum('bhqd,bhkd->bhqk', q, k) * scale
    p = jax.nn.softmax(s, axis=-1)
    o = jnp.einsum('bhqk,bhkd->bhqd', p, v)
    o = o.transpose(0, 2, 1, 3).reshape(B, S, heads * dim_head)
    return o @ wo + bo[0]


if __name__ == "__main__":
    # Module config (small): query_dim=32, heads=4, dim_head=8 -> inner_dim=32
    B, S, D = 2, 8, 32
    heads, dim_head = 4, 8
    inner = heads * dim_head

    key = jax.random.PRNGKey(0)
    kx, kq, kk, kv, ko, kb, kx2 = jax.random.split(key, 7)
    x = jax.random.normal(kx, (B, S, D), dtype=jnp.float32)
    wq = jax.random.normal(kq, (D, inner), dtype=jnp.float32) * 0.05
    wk = jax.random.normal(kk, (D, inner), dtype=jnp.float32) * 0.05
    wv = jax.random.normal(kv, (D, inner), dtype=jnp.float32) * 0.05
    wo = jax.random.normal(ko, (inner, D), dtype=jnp.float32) * 0.05
    bo = jax.random.normal(kb, (1, D), dtype=jnp.float32) * 0.05

    # bf16 MXU path -> loosened tolerance vs the f32 reference.
    ATOL = RTOL = 2e-2

    # Single-tile case (whole sequence fits one q/kv tile).
    out = attention_forward(x, wq, wk, wv, wo, bo, heads=heads, dim_head=dim_head)
    out = jax.block_until_ready(out)
    ref = _reference(x, wq, wk, wv, wo, bo, heads=heads, dim_head=dim_head)
    assert out.shape == (B, S, D)
    assert jnp.allclose(out, ref, atol=ATOL, rtol=RTOL), \
        "mismatch vs reference (single tile)"

    # Multi-tile case: exercise the KV-tiled online-softmax accumulation path.
    S2 = 16
    x2 = jax.random.normal(kx2, (B, S2, D), dtype=jnp.float32)
    out2 = attention_forward(x2, wq, wk, wv, wo, bo, heads=heads, dim_head=dim_head,
                             q_block=8, kv_block=8)
    out2 = jax.block_until_ready(out2)
    ref2 = _reference(x2, wq, wk, wv, wo, bo, heads=heads, dim_head=dim_head)
    assert out2.shape == (B, S2, D)
    assert jnp.allclose(out2, ref2, atol=ATOL, rtol=RTOL), \
        "mismatch vs reference (tiled)"

    print("KERNEL_OK")
</pallas_src>

<mosaic_0001>
module attributes {stable_mosaic.version = 11 : i64} {
  func.func @_qkv_proj_kernel(%arg0: i32, %arg1: i32, %arg2: memref<1x8x32xbf16, #tpu.memory_space<vmem>>, %arg3: memref<32x96xbf16, #tpu.memory_space<vmem>>, %arg4: memref<1x8x96xbf16, #tpu.memory_space<vmem>>) attributes {dimension_semantics = [#tpu.dimension_semantics<parallel>, #tpu.dimension_semantics<parallel>], iteration_bounds = array<i64: 2, 1>, scalar_prefetch = 0 : i64, scratch_operands = 0 : i64, tpu.core_type = #tpu.core_type<tc>, window_params = [{transform_indices = @transform_0, window_bounds = array<i64: 1, 8, 32>}, {pipeline_mode = #tpu.pipeline_mode<synchronous>, transform_indices = @transform_1, window_bounds = array<i64: 32, 96>}, {transform_indices = @transform_2, window_bounds = array<i64: 1, 8, 96>}]} {
    %c0 = arith.constant 0 : index
    %c0_0 = arith.constant 0 : index
    %c0_1 = arith.constant 0 : index
    %0 = vector.load %arg2[%c0, %c0_0, %c0_1] : memref<1x8x32xbf16, #tpu.memory_space<vmem>>, vector<1x8x32xbf16>
    %1 = vector.shape_cast %0 : vector<1x8x32xbf16> to vector<8x32xbf16>
    %c0_2 = arith.constant 0 : index
    %c0_3 = arith.constant 0 : index
    %2 = vector.load %arg3[%c0_2, %c0_3] : memref<32x96xbf16, #tpu.memory_space<vmem>>, vector<32x96xbf16>
    %cst = arith.constant dense<0.000000e+00> : vector<8x96xf32>
    %3 = tpu.matmul %1, %2, %cst {dimension_numbers = #tpu.dot_dimension_numbers<[1], [0], [0], [1], [0, 0, 1, 1], [], []>} : vector<8x32xbf16>, vector<32x96xbf16>, vector<8x96xf32> -> vector<8x96xf32>
    %4 = arith.truncf %3 : vector<8x96xf32> to vector<8x96xbf16>
    %c0_4 = arith.constant 0 : index
    %c0_5 = arith.constant 0 : index
    %c0_6 = arith.constant 0 : index
    %5 = vector.load %arg4[%c0_4, %c0_5, %c0_6] : memref<1x8x96xbf16, #tpu.memory_space<vmem>>, vector<1x8x96xbf16>
    %6 = vector.shape_cast %5 : vector<1x8x96xbf16> to vector<8x96xbf16>
    %7 = vector.shape_cast %4 : vector<8x96xbf16> to vector<1x8x96xbf16>
    tpu.vector_store %arg4[%c0_4, %c0_5, %c0_6], %7 {strides = array<i32>} : memref<1x8x96xbf16, #tpu.memory_space<vmem>>, vector<1x8x96xbf16>,
    return
  }
  func.func @transform_0(%arg0: i32, %arg1: i32) -> (i32, i32, i32) {
    %c0_i32 = arith.constant 0 : i32
    %c0_i32_0 = arith.constant 0 : i32
    return %arg0, %arg1, %c0_i32 : i32, i32, i32
  }
  func.func @transform_1(%arg0: i32, %arg1: i32) -> (i32, i32) {
    %c0_i32 = arith.constant 0 : i32
    %c0_i32_0 = arith.constant 0 : i32
    %c0_i32_1 = arith.constant 0 : i32
    return %c0_i32, %c0_i32_0 : i32, i32
  }
  func.func @transform_2(%arg0: i32, %arg1: i32) -> (i32, i32, i32) {
    %c0_i32 = arith.constant 0 : i32
    %c0_i32_0 = arith.constant 0 : i32
    return %arg0, %arg1, %c0_i32 : i32, i32, i32
  }
}

</mosaic_0001>

<llo_original>
// kernel: tpu_custom_call.1
$region0: #{tpu_custom_call.1}
  #allocation0 [shape = 'u32[]', space=smem, size = 0x4, offset = 0x4, fixed_abs, tag = 'smem constant byte address 0x4 - core index']
  #allocation1 [shape = 'u32[144,128]{1,0:T(1,128)}', space=vmem, size = 0x12000, scoped, tag = 'internal scratch']
  %s0 = inlined_call_operand.hbm [shape: bf16[2,8,32], index: 0, kind: input, shape index: {}]
  %s1 = inlined_call_operand.hbm [shape: bf16[32,96], index: 1, kind: input, shape index: {}]
  %s2 = inlined_call_operand.hbm [shape: bf16[2,8,96], index: 2, kind: output, shape index: {}]
  %s3 = sld [smem:[#allocation0]]
  $region49: #{tpu_custom_call.1} parent=0
    _
  %s5 = ssub.s32 1, %s3
  %s6 = scalar_select 0, %s5, %s3
  $region1: #{tpu_custom_call.1} parent=0
    #allocation2 [shape = 'u8[4096]{0}', space=vmem, size = 0x1000, scoped, tag = 'input window, operand 0']
    #allocation3 [shape = 's32[2]{0}', space=sflag, size = 0x8, scoped, tag = 'scoped memory for tpu_custom_call.1']
    #allocation4 [shape = 's32[2]{0}', space=sflag, size = 0x8, scoped, tag = 'scoped memory for tpu_custom_call.1']
    #allocation5 [shape = 'u8[8192]{0}', space=vmem, size = 0x2000, scoped, tag = 'input window, operand 1, single buffered']
    #allocation6 [shape = 's32[1]{0}', space=sflag, size = 0x4, scoped, tag = 'scoped memory for tpu_custom_call.1']
    #allocation7 [shape = 'u8[4096]{0}', space=vmem, size = 0x1000, scoped, tag = 'output window, operand 0']
    %7 = vsyncpa [#allocation3], 0
    %s8 = scalar_lea.sflag [#allocation3], 1
    %9 = vsyncpa %s8, 0
    %10 = vsyncpa [#allocation6], 0
    %11 = vsyncpa [#allocation4], 0
    %s12 = scalar_lea.sflag [#allocation4], 1
    %13 = vsyncpa %s12, 0
    loop: start=0, step=1, limit=4
    $region2: #{tpu_custom_call.1} parent=1 // loop_pre_header
      _
    $region3: #{tpu_custom_call.1} parent=1 // loop_header
      %s15 = sphi 0, %s19
      %p16 = scmp.ge.s32.totalorder %s15, 4
      %s22 = sphi 0, %s34
      %s23 = sphi 0, %s30
      %s24 = sphi 0, %s22
      %s25 = sphi 0, %s23
      %s26 = sphi 0, %s24
      %s27 = sphi 0, %s25
      %s39 = sphi 0, %s41
      %s42 = sphi 0, %s39
      %s43 = sphi 0, %s42
      %s59 = sphi 0, %s43
      %s63 = sphi 0, %s63
      %s65 = sphi 0, %s63
      %s66 = sphi 0, %s65
      %s80 = sphi 0, %s66
      %s88 = sphi 0, %s90
      %s91 = sphi 0, %s88
      %s92 = sphi 0, %s91
      %s108 = sphi 0, %s92
    $region4: #{tpu_custom_call.1} parent=1 // loop_header_branch
      %18 = sbr.rel (%p16) target = $region8
    $region5: #{tpu_custom_call.1} parent=1 // loop_body
      %s20 = ssub.s32 %s15, 1
      %s21 = ssub.s32 %s15, 2
      %s28 = sadd.s32 1, %s23
      %p29 = scmp.ge.s32.totalorder %s28, 1
      %s30 = scalar_select %p29, 0, %s28
      %s31 = sadd.s32 1, %s22
      %s32 = scalar_select %p29, %s31, %s22
      %p33 = scmp.ge.s32.totalorder %s32, 2
      %s34 = scalar_select %p33, 0, %s32
      %s35 = ssub.s32 %s22, %s34
      %s36 = ssub.s32 %s23, %s30
      %s37 = sor.u32 %s35, %s36
      %p38 = scmp.eq.s32.totalorder %s37, 0
      %s40 = sadd.s32 %s39, 1
      %s41 = scalar_select %p38, %s39, %s40
      %p44 = pneg %p38
      %p45 = scmp.eq.s32.totalorder %s15, 1
      %p46 = por %p44, %p45
      %p47 = scmp.ne.s32.totalorder %s39, %s42
      %p48 = scmp.eq.s32.totalorder %s15, 0
      %p49 = por %p47, %p48
      %p50 = scmp.ne.s32.totalorder %s39, %s42
      %p51 = scmp.eq.s32.totalorder %s20, 1
      %p52 = por %p50, %p51
      %p53 = scmp.ne.s32.totalorder %s42, %s43
      %p54 = scmp.eq.s32.totalorder %s20, 0
      %p55 = por %p53, %p54
      %p56 = scmp.ne.s32.totalorder %s42, %s43
      %p57 = scmp.eq.s32.totalorder %s21, 1
      %p58 = por %p56, %p57
      %p60 = scmp.ne.s32.totalorder %s43, %s59
      %p61 = scmp.eq.s32.totalorder %s21, 0
      %p62 = por %p60, %p61
      %s64 = sadd.s32 %s63, 1
      %p67 = scmp.eq.s32.totalorder %s15, 1
      %p68 = scmp.ne.s32.totalorder %s63, %s65
      %p69 = scmp.eq.s32.totalorder %s15, 0
      %p70 = por %p68, %p69
      %p71 = scmp.ne.s32.totalorder %s63, %s65
      %p72 = scmp.eq.s32.totalorder %s20, 1
      %p73 = por %p71, %p72
      %p74 = scmp.ne.s32.totalorder %s65, %s66
      %p75 = scmp.eq.s32.totalorder %s20, 0
      %p76 = por %p74, %p75
      %p77 = scmp.ne.s32.totalorder %s65, %s66
      %p78 = scmp.eq.s32.totalorder %s21, 1
      %p79 = por %p77, %p78
      %p81 = scmp.ne.s32.totalorder %s66, %s80
      %p82 = scmp.eq.s32.totalorder %s21, 0
      %p83 = por %p81, %p82
      %s84 = ssub.s32 %s22, %s34
      %s85 = ssub.s32 %s23, %s30
      %s86 = sor.u32 %s84, %s85
      %p87 = scmp.eq.s32.totalorder %s86, 0
      %s89 = sadd.s32 %s88, 1
      %s90 = scalar_select %p87, %s88, %s89
      %p93 = pneg %p87
      %p94 = scmp.eq.s32.totalorder %s15, 1
      %p95 = por %p93, %p94
      %p96 = scmp.ne.s32.totalorder %s88, %s91
      %p97 = scmp.eq.s32.totalorder %s15, 0
      %p98 = por %p96, %p97
      %p99 = scmp.ne.s32.totalorder %s88, %s91
      %p100 = scmp.eq.s32.totalorder %s20, 1
      %p101 = por %p99, %p100
      %p102 = scmp.ne.s32.totalorder %s91, %s92
      %p103 = scmp.eq.s32.totalorder %s20, 0
      %p104 = por %p102, %p103
      %p105 = scmp.ne.s32.totalorder %s91, %s92
      %p106 = scmp.eq.s32.totalorder %s21, 1
      %p107 = por %p105, %p106
      %p109 = scmp.ne.s32.totalorder %s92, %s108
      %p110 = scmp.eq.s32.totalorder %s21, 0
      %p111 = por %p109, %p110
      %p112 = scmp.le.s32.totalorder 1, %s15
      %p113 = scmp.lt.s32.totalorder %s15, 3
      %p114 = pnand %p112, %p113
      %p115 = pneg %p114
      // Predicated region
      $region9: #{tpu_custom_call.1} parent=5 // pred_check
        _
      $region10: #{tpu_custom_call.1} parent=5 // pred_check_branch
        %117 = sbr.rel (%p114) target = $region12
      $region11: #{tpu_custom_call.1} parent=5 // pred_region
        %s118 = ssub.s32 %s15, 1
        // Predicated region
        $region13: #{tpu_custom_call.1} parent=11 // pred_check
          %p119 = pneg %p76
        $region14: #{tpu_custom_call.1} parent=11 // pred_check_branch
          %121 = sbr.rel (%p119) target = $region16
        $region15: #{tpu_custom_call.1} parent=11 // pred_region
          %s123 = ssub.s32 256, 256
          %124 = vsyncadd [#allocation6], %s123
          %s125 = sshll.u32 [#allocation5], 4
          %s126 = int_to_ptr.vmem [resolvable:$true] %s125
          %131 = dma.hbm_to_vmem [thread:$0]  %s1, 256, %s126, [#allocation6], 64, 64, 4
        $region16: #{tpu_custom_call.1} parent=11 // pred_fallthru
          _
      $region12: #{tpu_custom_call.1} parent=5 // pred_fallthru
        _
      %p132 = scmp.lt.s32.totalorder %s15, 2
      // Predicated region
      $region17: #{tpu_custom_call.1} parent=5 // pred_check
        %p133 = pneg %p132
      $region18: #{tpu_custom_call.1} parent=5 // pred_check_branch
        %135 = sbr.rel (%p133) target = $region20
      $region19: #{tpu_custom_call.1} parent=5 // pred_region
        // Predicated region
        $region21: #{tpu_custom_call.1} parent=19 // pred_check
          %p136 = pneg %p49
        $region22: #{tpu_custom_call.1} parent=19 // pred_check_branch
          %138 = sbr.rel (%p136) target = $region24
        $region23: #{tpu_custom_call.1} parent=19 // pred_region
          %s139 = sand.u32 %s39, 1
          %s140 = scalar_lea.sflag [#allocation3], %s139
          %s141 = sand.u32 %s39, 1
          %s142 = smul.addr %s141, 4
          %s143 = scalar_lea.vmem [#allocation2], %s142
          %s145 = ssub.s32 64, 64
          %146 = vsyncadd %s140, %s145
          %s147 = sadd.s32 %s23, %s22
          %s148 = smul.addr %s147, 64
          %s149 = scalar_lea.hbm %s0, %s148
          %s151 = sshll.u32 %s143, 4
          %s152 = int_to_ptr.vmem [resolvable:$true] %s151
          %154 = dma.hbm_to_vmem [thread:$0]  %s149, 64, %s152, %s140
        $region24: #{tpu_custom_call.1} parent=19 // pred_fallthru
          _
      $region20: #{tpu_custom_call.1} parent=5 // pred_fallthru
        _
      %p155 = scmp.le.s32.totalorder 1, %s15
      %p156 = scmp.lt.s32.totalorder %s15, 3
      %p157 = pnand %p155, %p156
      %p158 = pneg %p157
      // Predicated region
      $region25: #{tpu_custom_call.1} parent=5 // pred_check
        _
      $region26: #{tpu_custom_call.1} parent=5 // pred_check_branch
        %160 = sbr.rel (%p157) target = $region28
      $region27: #{tpu_custom_call.1} parent=5 // pred_region
        %s161 = ssub.s32 %s15, 1
        %s162 = sand.u32 %s42, 1
        %s163 = scalar_lea.sflag [#allocation3], %s162
        %s164 = sand.u32 %s42, 1
        %s165 = smul.addr %s164, 4
        %s166 = scalar_lea.vmem [#allocation2], %s165
        // Predicated region
        $region29: #{tpu_custom_call.1} parent=27 // pred_check
          %p167 = pneg %p55
        $region30: #{tpu_custom_call.1} parent=27 // pred_check_branch
          %169 = sbr.rel (%p167) target = $region32
        $region31: #{tpu_custom_call.1} parent=27 // pred_region
          %170 = dma.done %s163, 64
        $region32: #{tpu_custom_call.1} parent=27 // pred_fallthru
          _
        // Predicated region
        $region33: #{tpu_custom_call.1} parent=27 // pred_check
          %p171 = pneg %p76
        $region34: #{tpu_custom_call.1} parent=27 // pred_check_branch
          %173 = sbr.rel (%p171) target = $region36
        $region35: #{tpu_custom_call.1} parent=27 // pred_region
          %174 = dma.done [#allocation6], 256
        $region36: #{tpu_custom_call.1} parent=27 // pred_fallthru
          _
        %s175 = sand.u32 %s42, 1
        %s176 = scalar_lea.sflag [#allocation3], %s175
        %s177 = sand.u32 %s42, 1
        %s178 = smul.addr %s177, 4
        %s179 = scalar_lea.vmem [#allocation2], %s178
        %p180 = pneg %p55
        %p181 = pneg %p52
        %p182 = pneg %p76
        %p183 = pneg %p73
        %p184 = pneg %p104
        %p185 = pneg %p101
        %s186 = sand.u32 %s91, 1
        %s187 = scalar_lea.sflag [#allocation4], %s186
        %s188 = sand.u32 %s91, 1
        %s189 = smul.addr %s188, 4
        %s190 = scalar_lea.vmem [#allocation7], %s189
        %v192 = vld [vmem:[%s166] sm:$0xf]
        %v193 = vld [vmem:[#allocation5] sm:$0xf]
        %v194 = vld [vmem:[#allocation5 + $0x4] sm:$0xf]
        %v195 = vld [vmem:[#allocation5 + $0x8] sm:$0xf]
        %v196 = vld [vmem:[#allocation5 + $0xc] sm:$0xf]
        %v201 = vunpack.c.l.b16 %v193
        %v202 = vunpack.c.l.b16 %v194
        %v203 = vunpack.c.l.b16 %v195
        %v204 = vunpack.c.l.b16 %v196
        %v205 = vpack.c.b16 %v202, %v201
        %v206 = vpack.c.b16 %v204, %v203
        %vm209 = vcmask 261120
        %v211 = vsel %vm209, %v192, 0
        %213 = vmatprep.subr.bf16.mxu0 0
        %214 = vmatpush1.bf16.msra.mxu0 %v205
        %215 = vmatprep.subr.bf16.mxu0 0
        %216 = vmatpush1.bf16.msra.mxu0 %v206
        %217 = vmatprep.subr.bf16.mxu0 0
        %218 = vmatpush1.bf16.msra.mxu0 0
        %219 = vmatprep.subr.bf16.mxu0 0
        %220 = vmatpush1.bf16.msra.mxu0 0
        %221 = vmatprep.subr.bf16.mxu0 0
        %222 = vmatpush1.bf16.msra.mxu0 0
        %223 = vmatprep.subr.bf16.mxu0 0
        %224 = vmatpush1.bf16.msra.mxu0 0
        %225 = vmatprep.subr.bf16.mxu0 0
        %226 = vmatpush1.bf16.msra.mxu0 0
        %227 = vmatprep.subr.bf16.mxu0 0
        %228 = vmatpush1.bf16.msra.mxu0 0
        %229 = vmatprep.subr.bf16.mxu0 0
        %230 = vmatpush1.bf16.msra.mxu0 0
        %231 = vmatprep.subr.bf16.mxu0 0
        %232 = vmatpush1.bf16.msra.mxu0 0
        %233 = vmatprep.subr.bf16.mxu0 0
        %234 = vmatpush1.bf16.msra.mxu0 0
        %235 = vmatprep.subr.bf16.mxu0 0
        %236 = vmatpush1.bf16.msra.mxu0 0
        %237 = vmatprep.subr.bf16.mxu0 0
        %238 = vmatpush1.bf16.msra.mxu0 0
        %239 = vmatprep.subr.bf16.mxu0 0
        %240 = vmatpush1.bf16.msra.mxu0 0
        %241 = vmatprep.subr.bf16.mxu0 0
        %242 = vmatpush1.bf16.msra.mxu0 0
        %243 = vmatprep.subr.bf16.mxu0 0
        %244 = vmatpush1.bf16.msra.mxu0 0
        %245 = vmatprep.mubr.bf16.mxu0 0
        %246 = vmatmul.mubr.bf16.gmra.mrb[0].mxu0 %v211
        %v247 = vpop.f32.mrb[0].mxu0
        %v248 = vadd.f32 0.0, %v247
        %v249 = vpop.f32.mrb[0].mxu0
        %v250 = vpop.f32.mrb[0].mxu0
        %v251 = vpop.f32.mrb[0].mxu0
        %252 = vdwg.mxu0
        %v253 = vpack.c.bf16 %v248, %v248
        %vm254 = vcmask 781312
        %255 = vst.msk [vmem:[%s190] sm:$0xf] %vm254, %v253
        %s256 = sand.u32 %s91, 1
        %s257 = scalar_lea.sflag [#allocation4], %s256
        %s258 = sand.u32 %s91, 1
        %s259 = smul.addr %s258, 4
        %s260 = scalar_lea.vmem [#allocation7], %s259
        // Predicated region
        $region37: #{tpu_custom_call.1} parent=27 // pred_check
          %p261 = pneg %p101
        $region38: #{tpu_custom_call.1} parent=27 // pred_check_branch
          %263 = sbr.rel (%p261) target = $region40
        $region39: #{tpu_custom_call.1} parent=27 // pred_region
          %s265 = ssub.s32 64, 64
          %266 = vsyncadd %s257, %s265
          %s267 = sadd.s32 %s25, %s24
          %s268 = smul.addr %s267, 64
          %s269 = scalar_lea.hbm %s2, %s268
          %s271 = sshll.u32 %s260, 4
          %s272 = int_to_ptr.vmem [resolvable:$true] %s271
          %274 = dma.vmem_to_hbm [thread:$0]  %s272, 64, %s269, %s257
        $region40: #{tpu_custom_call.1} parent=27 // pred_fallthru
          _
      $region28: #{tpu_custom_call.1} parent=5 // pred_fallthru
        _
      %p275 = scmp.le.s32.totalorder 2, %s15
      // Predicated region
      $region41: #{tpu_custom_call.1} parent=5 // pred_check
        %p276 = pneg %p275
      $region42: #{tpu_custom_call.1} parent=5 // pred_check_branch
        %278 = sbr.rel (%p276) target = $region44
      $region43: #{tpu_custom_call.1} parent=5 // pred_region
        %s279 = ssub.s32 %s15, 2
        // Predicated region
        $region45: #{tpu_custom_call.1} parent=43 // pred_check
          %p280 = pneg %p107
        $region46: #{tpu_custom_call.1} parent=43 // pred_check_branch
          %282 = sbr.rel (%p280) target = $region48
        $region47: #{tpu_custom_call.1} parent=43 // pred_region
          %s283 = sand.u32 %s92, 1
          %s284 = scalar_lea.sflag [#allocation4], %s283
          %s285 = sand.u32 %s92, 1
          %s286 = smul.addr %s285, 4
          %s287 = scalar_lea.vmem [#allocation7], %s286
          %288 = dma.done %s284, 64
        $region48: #{tpu_custom_call.1} parent=43 // pred_fallthru
          _
      $region44: #{tpu_custom_call.1} parent=5 // pred_fallthru
        _
    $region6: #{tpu_custom_call.1} parent=1 // loop_footer
      %s19 = sadd.s32 1, %s15
    $region7: #{tpu_custom_call.1} parent=1 // loop_footer_branch
      %14 = sbr.rel target = $region3
    $region8: #{tpu_custom_call.1} parent=1 // loop_exit
      _
    %289 = vsyncpa [#allocation3], 1
    %s290 = scalar_lea.sflag [#allocation3], 1
    %291 = vsyncpa %s290, 1
    %292 = vsyncpa [#allocation6], 1
    %293 = vsyncpa [#allocation4], 1
    %s294 = scalar_lea.sflag [#allocation4], 1
    %295 = vsyncpa %s294, 1

</llo_original>
